<compile_context>
chip_gen: v5e
topology: v5e:2x2
jax: 0.10.0
libtpu: 0.0.40
codegen_flags: <defaults>
</compile_context>

<pallas_src>
from functools import partial

import jax
import jax.numpy as jnp
from jax.experimental import pallas as pl
from jax.experimental.pallas import tpu as pltpu

N_STAT_CORES = 2  # split pass-1 stat accumulation so both v7x TCs have work


def _round_up(x, m):
    return ((x + m - 1) // m) * m


def _vmem_budget():
    """Per-generation VMEM sizing: (tile-picker budget, compiler vmem limit)."""
    try:
        cap = getattr(pltpu.get_tpu_info(), "vmem_capacity_bytes", None)
        if not cap:
            cap = 64 << 20
    except Exception:
        cap = 64 << 20                       # conservative fallback (v7x per-TC)
    limit = min((cap * 3) // 4, 96 << 20)    # v5e/v6e -> 96 MiB, v7x -> 48 MiB
    return limit // 2, limit


def _pick_batch_tile(b, hw, c, hidden, n_pad, budget_bytes):
    """Largest batch tile whose padded, double-buffered working set fits the
    budget.  Tiles are multiples of 16 so the bf16 h blocks are sublane-aligned."""
    r8 = lambda v: _round_up(v, 8)
    r16 = lambda v: _round_up(v, 16)
    r128 = lambda v: _round_up(v, 128)
    hid_p = r128(hidden)
    # resident operands (counted x2: Pallas double-buffers every blocked operand)
    resident = 2 * (r16(c) * hid_p * 2               # w1 (bf16)
                    + r16(hidden) * n_pad * 2        # w2 (bf16)
                    + 8 * n_pad * 4                  # b2 (f32)
                    + 8 * hid_p * 4                  # gamma/beta (f32)
                    + N_STAT_CORES * 8 * hid_p * 4)  # stats (f32)
    tb = 512
    while tb > 16:
        x_tile = tb * r8(c) * r128(hw) * 4           # f32 NCHW x block (pass 1)
        h_tile = r16(tb) * hid_p * 2                 # bf16 h block (both passes)
        o_tile = r8(tb) * n_pad * 4                  # f32 output block (pass 2)
        if 2 * max(x_tile + h_tile, h_tile + o_tile) + resident <= budget_bytes:
            break
        tb //= 2
    return min(tb, _round_up(b, 16))


def encode_stats_kernel(x_ref, w1_ref, h_ref, stats_ref):
    """Pass 1: in-kernel global avgpool (lane reduce) -> Linear1 (bf16 MXU),
    plus per-core accumulation of raw BN sums (sum h, sum h*h)."""
    # x block is (TB, C, HW); reduce the minor (lane) axis -> [TB, C] with C on
    # lanes, i.e. matmul-K-ready.  The 1/HW scale is folded into w1.
    feat = jnp.sum(x_ref[...], axis=2)                              # f32
    h = jnp.dot(feat.astype(jnp.bfloat16), w1_ref[...],
                preferred_element_type=jnp.float32)                 # [TB, hidden] f32
    h_ref[...] = h.astype(jnp.bfloat16)                             # bf16 roundtrip

    @pl.when(pl.program_id(1) == 0)
    def _():
        stats_ref[...] = jnp.zeros_like(stats_ref)

    # raw sums; zero-padded batch rows contribute nothing (pre-BN bias dropped)
    stats_ref[...] += jnp.concatenate(
        [jnp.sum(h, axis=0, keepdims=True),
         jnp.sum(h * h, axis=0, keepdims=True)], axis=0)            # [2, hidden]


def bn_relu_proj_kernel(h_ref, stats_ref, gb_ref, w2_ref, b2_ref, out_ref,
                        *, inv_n, n_stat_blocks):
    """Pass 2: BatchNorm1d (train-mode batch stats) -> ReLU -> Linear2 (bf16 MXU)."""
    h = h_ref[...].astype(jnp.float32)                   # [TB, hidden]

    st = stats_ref[0]                                    # combine per-core sums
    for c in range(1, n_stat_blocks):
        st = st + stats_ref[c]
    mean = st[0:1, :] * inv_n                            # E[h]
    var = st[1:2, :] * inv_n - mean * mean               # biased var (train mode)
    inv_std = jax.lax.rsqrt(var + 1e-5)
    gamma = gb_ref[0:1, :]
    beta = gb_ref[1:2, :]

    hn = jnp.maximum((h - mean) * (inv_std * gamma) + beta, 0.0)    # BN + ReLU

    out_ref[...] = jnp.dot(hn.astype(jnp.bfloat16), w2_ref[...],
                           preferred_element_type=jnp.float32) + b2_ref[...]


def encoder_wrapper_forward(x, params):
    """x: [B, C, H, W] float32 (NCHW). Returns projector output [B, projection_size]."""
    B, C, H, W = x.shape
    HW = H * W
    hidden = params["w1"].shape[1]
    proj = params["w2"].shape[1]
    n_pad = _round_up(max(proj, 128), 128)               # lane-dense output width

    budget, vmem_limit = _vmem_budget()
    tb = _pick_batch_tile(B, HW, C, hidden, n_pad, budget)

    # No wrapper-side transpose or dtype cast of x: it streams once, as-is.
    x3 = x.reshape(B, C, HW)
    Bp = _round_up(B, N_STAT_CORES * tb)
    if Bp != B:
        # zero rows are exact no-ops for the BN sums (pre-BN bias is folded away)
        x3 = jnp.pad(x3, ((0, Bp - B), (0, 0), (0, 0)))
    n_per_core = Bp // (N_STAT_CORES * tb)
    n_tiles = Bp // tb

    # resident weights: bf16 MXU operands; avgpool 1/HW folded into w1.
    # params["b1"] intentionally unused: a pre-BN bias is an exact no-op.
    w1 = (params["w1"] * (1.0 / HW)).astype(jnp.bfloat16)                    # [C, hidden]
    w2p = jnp.zeros((hidden, n_pad), jnp.bfloat16
                    ).at[:, :proj].set(params["w2"].astype(jnp.bfloat16))    # [hidden, 128k]
    b2p = jnp.zeros((1, n_pad), jnp.float32
                    ).at[:, :proj].set(params["b2"].astype(jnp.float32))     # [1, 128k]
    gb = jnp.stack([params["gamma"], params["beta"]], axis=0
                   ).astype(jnp.float32)                                     # [2, hidden]

    # ---- pass 1: stream x tiles -> bf16 h tiles + per-core raw BN sums ----
    h, stats = pl.pallas_call(
        encode_stats_kernel,
        grid=(N_STAT_CORES, n_per_core),
        in_specs=[
            pl.BlockSpec((tb, C, HW), lambda c, i: (c * n_per_core + i, 0, 0)),
            pl.BlockSpec((C, hidden), lambda c, i: (0, 0)),           # w1 resident
        ],
        out_specs=[
            pl.BlockSpec((tb, hidden), lambda c, i: (c * n_per_core + i, 0)),
            pl.BlockSpec((None, 2, hidden), lambda c, i: (c, 0, 0)),  # per-core sums
        ],
        out_shape=[
            jax.ShapeDtypeStruct((Bp, hidden), jnp.bfloat16),
            jax.ShapeDtypeStruct((N_STAT_CORES, 2, hidden), jnp.float32),
        ],
        compiler_params=pltpu.CompilerParams(
            dimension_semantics=("parallel", "arbitrary"),
            vmem_limit_bytes=vmem_limit),
    )(x3, w1)

    # ---- pass 2: BatchNorm (full-batch stats) + ReLU + final projection ----
    out_p = pl.pallas_call(
        partial(bn_relu_proj_kernel, inv_n=1.0 / float(B),
                n_stat_blocks=N_STAT_CORES),
        grid=(n_tiles,),
        in_specs=[
            pl.BlockSpec((tb, hidden), lambda i: (i, 0)),             # h streams
            pl.BlockSpec((N_STAT_CORES, 2, hidden), lambda i: (0, 0, 0)),
            pl.BlockSpec((2, hidden), lambda i: (0, 0)),              # gamma/beta
            pl.BlockSpec((hidden, n_pad), lambda i: (0, 0)),          # w2 resident
            pl.BlockSpec((1, n_pad), lambda i: (0, 0)),               # b2 resident
        ],
        out_specs=pl.BlockSpec((tb, n_pad), lambda i: (i, 0)),
        out_shape=jax.ShapeDtypeStruct((Bp, n_pad), jnp.float32),
        compiler_params=pltpu.CompilerParams(
            dimension_semantics=("parallel",),
            vmem_limit_bytes=vmem_limit),
    )(h, stats, gb, w2p, b2p)

    return out_p[:B, :proj]


if __name__ == "__main__":
    key = jax.random.PRNGKey(0)
    # Small shapes consistent with the module: the hooked avgpool output of a
    # resnet-style trunk has C channels -> projector input dim == C.
    B, C, H, W = 2, 64, 8, 8
    hidden_size, projection_size = 128, 32

    k = jax.random.split(key, 5)
    x = jax.random.normal(k[0], (B, C, H, W), jnp.float32)

    params = {
        # Linear(dim=C, hidden_size)
        "w1": jax.random.normal(k[1], (C, hidden_size), jnp.float32) / jnp.sqrt(C),
        # bias of the first Linear: exact no-op before train-mode BatchNorm,
        # so the kernel folds it away (kept here for module fidelity).
        "b1": 0.01 * jax.random.normal(k[2], (hidden_size,), jnp.float32),
        # BatchNorm1d(hidden_size) affine params (PyTorch default init)
        "gamma": jnp.ones((hidden_size,), jnp.float32),
        "beta": jnp.zeros((hidden_size,), jnp.float32),
        # Linear(hidden_size, projection_size)
        "w2": jax.random.normal(k[3], (hidden_size, projection_size),
                                jnp.float32) / jnp.sqrt(hidden_size),
        "b2": 0.01 * jax.random.normal(k[4], (projection_size,), jnp.float32),
    }

    out = encoder_wrapper_forward(x, params)
    jax.block_until_ready(out)
    assert out.shape == (B, projection_size), out.shape
    assert out.dtype == jnp.float32
    print("KERNEL_OK")
</pallas_src>

<mosaic_0001>
module attributes {stable_mosaic.version = 11 : i64} {
  func.func @encode_stats_kernel(%arg0: i32, %arg1: i32, %arg2: memref<16x64x64xf32, #tpu.memory_space<vmem>>, %arg3: memref<64x128xbf16, #tpu.memory_space<vmem>>, %arg4: memref<16x128xbf16, #tpu.memory_space<vmem>>, %arg5: memref<1x2x128xf32, #tpu.memory_space<vmem>>) attributes {dimension_semantics = [#tpu.dimension_semantics<parallel>, #tpu.dimension_semantics<arbitrary>], iteration_bounds = array<i64: 2, 1>, scalar_prefetch = 0 : i64, scratch_operands = 0 : i64, tpu.core_type = #tpu.core_type<tc>, window_params = [{transform_indices = @transform_0, window_bounds = array<i64: 16, 64, 64>}, {pipeline_mode = #tpu.pipeline_mode<synchronous>, transform_indices = @transform_1, window_bounds = array<i64: 64, 128>}, {transform_indices = @transform_2, window_bounds = array<i64: 16, 128>}, {transform_indices = @transform_3, window_bounds = array<i64: 1, 2, 128>}]} {
    %c0 = arith.constant 0 : index
    %c0_0 = arith.constant 0 : index
    %c0_1 = arith.constant 0 : index
    %0 = vector.load %arg2[%c0, %c0_0, %c0_1] : memref<16x64x64xf32, #tpu.memory_space<vmem>>, vector<16x64x64xf32>
    %cst = arith.constant dense<0.000000e+00> : vector<16x64xf32>
    %1 = vector.multi_reduction <add>, %0, %cst [2] : vector<16x64x64xf32> to vector<16x64xf32>
    %2 = arith.truncf %1 : vector<16x64xf32> to vector<16x64xbf16>
    %c0_2 = arith.constant 0 : index
    %c0_3 = arith.constant 0 : index
    %3 = vector.load %arg3[%c0_2, %c0_3] : memref<64x128xbf16, #tpu.memory_space<vmem>>, vector<64x128xbf16>
    %cst_4 = arith.constant dense<0.000000e+00> : vector<16x128xf32>
    %4 = tpu.matmul %2, %3, %cst_4 {dimension_numbers = #tpu.dot_dimension_numbers<[1], [0], [0], [1], [0, 0, 1, 1], [], []>} : vector<16x64xbf16>, vector<64x128xbf16>, vector<16x128xf32> -> vector<16x128xf32>
    %5 = arith.truncf %4 : vector<16x128xf32> to vector<16x128xbf16>
    %c0_5 = arith.constant 0 : index
    %c0_6 = arith.constant 0 : index
    %6 = vector.load %arg4[%c0_5, %c0_6] : memref<16x128xbf16, #tpu.memory_space<vmem>>, vector<16x128xbf16>
    tpu.vector_store %arg4[%c0_5, %c0_6], %5 {strides = array<i32>} : memref<16x128xbf16, #tpu.memory_space<vmem>>, vector<16x128xbf16>,
    %c0_i32 = arith.constant 0 : i32
    %7 = arith.cmpi eq, %arg1, %c0_i32 : i32
    %8 = arith.extui %7 : i1 to i32
    %c0_i32_7 = arith.constant 0 : i32
    %9 = arith.cmpi ne, %8, %c0_i32_7 : i32
    scf.if %9 {
      %cst_16 = arith.constant 0.000000e+00 : f32
      %22 = vector.broadcast %cst_16 : f32 to vector<2x128xf32>
      %c0_17 = arith.constant 0 : index
      %c0_18 = arith.constant 0 : index
      %c0_19 = arith.constant 0 : index
      %23 = vector.load %arg5[%c0_17, %c0_18, %c0_19] : memref<1x2x128xf32, #tpu.memory_space<vmem>>, vector<1x2x128xf32>
      %24 = vector.shape_cast %23 : vector<1x2x128xf32> to vector<2x128xf32>
      %25 = vector.shape_cast %22 : vector<2x128xf32> to vector<1x2x128xf32>
      tpu.vector_store %arg5[%c0_17, %c0_18, %c0_19], %25 {strides = array<i32>} : memref<1x2x128xf32, #tpu.memory_space<vmem>>, vector<1x2x128xf32>,
    } else {
    }
    %c0_8 = arith.constant 0 : index
    %c0_9 = arith.constant 0 : index
    %c0_10 = arith.constant 0 : index
    %10 = vector.load %arg5[%c0_8, %c0_9, %c0_10] : memref<1x2x128xf32, #tpu.memory_space<vmem>>, vector<1x2x128xf32>
    %11 = vector.shape_cast %10 : vector<1x2x128xf32> to vector<2x128xf32>
    %cst_11 = arith.constant dense<0.000000e+00> : vector<128xf32>
    %12 = vector.multi_reduction <add>, %4, %cst_11 [0] : vector<16x128xf32> to vector<128xf32>
    %13 = vector.shape_cast %12 : vector<128xf32> to vector<1x128xf32>
    %14 = arith.mulf %4, %4 : vector<16x128xf32>
    %cst_12 = arith.constant dense<0.000000e+00> : vector<128xf32>
    %15 = vector.multi_reduction <add>, %14, %cst_12 [0] : vector<16x128xf32> to vector<128xf32>
    %16 = vector.shape_cast %15 : vector<128xf32> to vector<1x128xf32>
    %17 = tpu.concatenate %13, %16 in 0 : vector<1x128xf32>, vector<1x128xf32> -> vector<2x128xf32>
    %18 = arith.addf %11, %17 : vector<2x128xf32>
    %c0_13 = arith.constant 0 : index
    %c0_14 = arith.constant 0 : index
    %c0_15 = arith.constant 0 : index
    %19 = vector.load %arg5[%c0_13, %c0_14, %c0_15] : memref<1x2x128xf32, #tpu.memory_space<vmem>>, vector<1x2x128xf32>
    %20 = vector.shape_cast %19 : vector<1x2x128xf32> to vector<2x128xf32>
    %21 = vector.shape_cast %18 : vector<2x128xf32> to vector<1x2x128xf32>
    tpu.vector_store %arg5[%c0_13, %c0_14, %c0_15], %21 {strides = array<i32>} : memref<1x2x128xf32, #tpu.memory_space<vmem>>, vector<1x2x128xf32>,
    return
  }
  func.func @transform_0(%arg0: i32, %arg1: i32) -> (i32, i32, i32) {
    %c1_i32 = arith.constant 1 : i32
    %0 = arith.muli %arg0, %c1_i32 : i32
    %1 = arith.addi %0, %arg1 : i32
    %c0_i32 = arith.constant 0 : i32
    %c0_i32_0 = arith.constant 0 : i32
    %c0_i32_1 = arith.constant 0 : i32
    return %1, %c0_i32, %c0_i32_0 : i32, i32, i32
  }
  func.func @transform_1(%arg0: i32, %arg1: i32) -> (i32, i32) {
    %c0_i32 = arith.constant 0 : i32
    %c0_i32_0 = arith.constant 0 : i32
    %c0_i32_1 = arith.constant 0 : i32
    return %c0_i32, %c0_i32_0 : i32, i32
  }
  func.func @transform_2(%arg0: i32, %arg1: i32) -> (i32, i32) {
    %c1_i32 = arith.constant 1 : i32
    %0 = arith.muli %arg0, %c1_i32 : i32
    %1 = arith.addi %0, %arg1 : i32
    %c0_i32 = arith.constant 0 : i32
    %c0_i32_0 = arith.constant 0 : i32
    return %1, %c0_i32 : i32, i32
  }
  func.func @transform_3(%arg0: i32, %arg1: i32) -> (i32, i32, i32) {
    %c0_i32 = arith.constant 0 : i32
    %c0_i32_0 = arith.constant 0 : i32
    %c0_i32_1 = arith.constant 0 : i32
    return %arg0, %c0_i32, %c0_i32_0 : i32, i32, i32
  }
}

</mosaic_0001>

<llo_original>
// kernel: tpu_custom_call.1
$region0: #{tpu_custom_call.1}
  #allocation0 [shape = 'u32[]', space=smem, size = 0x4, offset = 0x4, fixed_abs, tag = 'smem constant byte address 0x4 - core index']
  #allocation1 [shape = 'u32[72,128]{1,0:T(1,128)}', space=vmem, size = 0x9000, scoped, tag = 'internal scratch']
  %s0 = inlined_call_operand.hbm [shape: f32[32,64,64], index: 0, kind: input, shape index: {}]
  %s1 = inlined_call_operand.hbm [shape: bf16[64,128], index: 1, kind: input, shape index: {}]
  %s2 = inlined_call_operand.hbm [shape: bf16[32,128], index: 2, kind: output, shape index: {0}]
  %s3 = inlined_call_operand.hbm [shape: f32[2,2,128], index: 3, kind: output, shape index: {1}]
  %4 = xla_tuple %s2, %s3
  %s5 = sld [smem:[#allocation0]]
  $region61: #{tpu_custom_call.1} parent=0
    _
  %s7 = ssub.s32 1, %s5
  %s8 = scalar_select 0, %s7, %s5
  $region1: #{tpu_custom_call.1} parent=0
    #allocation2 [shape = 'u8[1048576]{0}', space=vmem, size = 0x100000, scoped, tag = 'input window, operand 0']
    #allocation3 [shape = 's32[2]{0}', space=sflag, size = 0x8, scoped, tag = 'scoped memory for tpu_custom_call.1']
    #allocation4 [shape = 's32[2]{0}', space=sflag, size = 0x8, scoped, tag = 'scoped memory for tpu_custom_call.1']
    #allocation5 [shape = 'u8[16384]{0}', space=vmem, size = 0x4000, scoped, tag = 'input window, operand 1, single buffered']
    #allocation6 [shape = 's32[1]{0}', space=sflag, size = 0x4, scoped, tag = 'scoped memory for tpu_custom_call.1']
    #allocation7 [shape = 'u8[8192]{0}', space=vmem, size = 0x2000, scoped, tag = 'output window, operand 0']
    #allocation8 [shape = 'u8[2048]{0}', space=vmem, size = 0x800, scoped, tag = 'output window, operand 1']
    #allocation9 [shape = 's32[2]{0}', space=sflag, size = 0x8, scoped, tag = 'scoped memory for tpu_custom_call.1']
    %9 = vsyncpa [#allocation3], 0
    %s10 = scalar_lea.sflag [#allocation3], 1
    %11 = vsyncpa %s10, 0
    %12 = vsyncpa [#allocation6], 0
    %13 = vsyncpa [#allocation4], 0
    %s14 = scalar_lea.sflag [#allocation4], 1
    %15 = vsyncpa %s14, 0
    %16 = vsyncpa [#allocation9], 0
    %s17 = scalar_lea.sflag [#allocation9], 1
    %18 = vsyncpa %s17, 0
    loop: start=0, step=1, limit=4
    $region2: #{tpu_custom_call.1} parent=1 // loop_pre_header
      _
    $region3: #{tpu_custom_call.1} parent=1 // loop_header
      %s20 = sphi 0, %s24
      %p21 = scmp.ge.s32.totalorder %s20, 4
      %s27 = sphi 0, %s39
      %s28 = sphi 0, %s35
      %s29 = sphi 0, %s27
      %s30 = sphi 0, %s28
      %s31 = sphi 0, %s29
      %s32 = sphi 0, %s30
      %s44 = sphi 0, %s46
      %s47 = sphi 0, %s44
      %s48 = sphi 0, %s47
      %s64 = sphi 0, %s48
      %s68 = sphi 0, %s68
      %s70 = sphi 0, %s68
      %s71 = sphi 0, %s70
      %s85 = sphi 0, %s71
      %s93 = sphi 0, %s95
      %s96 = sphi 0, %s93
      %s97 = sphi 0, %s96
      %s113 = sphi 0, %s97
      %s119 = sphi 0, %s121
      %s122 = sphi 0, %s119
      %s123 = sphi 0, %s122
      %s139 = sphi 0, %s123
    $region4: #{tpu_custom_call.1} parent=1 // loop_header_branch
      %23 = sbr.rel (%p21) target = $region8
    $region5: #{tpu_custom_call.1} parent=1 // loop_body
      %s25 = ssub.s32 %s20, 1
      %s26 = ssub.s32 %s20, 2
      %s33 = sadd.s32 1, %s28
      %p34 = scmp.ge.s32.totalorder %s33, 1
      %s35 = scalar_select %p34, 0, %s33
      %s36 = sadd.s32 1, %s27
      %s37 = scalar_select %p34, %s36, %s27
      %p38 = scmp.ge.s32.totalorder %s37, 2
      %s39 = scalar_select %p38, 0, %s37
      %s40 = sadd.s32 %s27, %s28
      %s41 = sadd.s32 %s39, %s35
      %s42 = ssub.s32 %s40, %s41
      %p43 = scmp.eq.s32.totalorder %s42, 0
      %s45 = sadd.s32 %s44, 1
      %s46 = scalar_select %p43, %s44, %s45
      %p49 = pneg %p43
      %p50 = scmp.eq.s32.totalorder %s20, 1
      %p51 = por %p49, %p50
      %p52 = scmp.ne.s32.totalorder %s44, %s47
      %p53 = scmp.eq.s32.totalorder %s20, 0
      %p54 = por %p52, %p53
      %p55 = scmp.ne.s32.totalorder %s44, %s47
      %p56 = scmp.eq.s32.totalorder %s25, 1
      %p57 = por %p55, %p56
      %p58 = scmp.ne.s32.totalorder %s47, %s48
      %p59 = scmp.eq.s32.totalorder %s25, 0
      %p60 = por %p58, %p59
      %p61 = scmp.ne.s32.totalorder %s47, %s48
      %p62 = scmp.eq.s32.totalorder %s26, 1
      %p63 = por %p61, %p62
      %p65 = scmp.ne.s32.totalorder %s48, %s64
      %p66 = scmp.eq.s32.totalorder %s26, 0
      %p67 = por %p65, %p66
      %s69 = sadd.s32 %s68, 1
      %p72 = scmp.eq.s32.totalorder %s20, 1
      %p73 = scmp.ne.s32.totalorder %s68, %s70
      %p74 = scmp.eq.s32.totalorder %s20, 0
      %p75 = por %p73, %p74
      %p76 = scmp.ne.s32.totalorder %s68, %s70
      %p77 = scmp.eq.s32.totalorder %s25, 1
      %p78 = por %p76, %p77
      %p79 = scmp.ne.s32.totalorder %s70, %s71
      %p80 = scmp.eq.s32.totalorder %s25, 0
      %p81 = por %p79, %p80
      %p82 = scmp.ne.s32.totalorder %s70, %s71
      %p83 = scmp.eq.s32.totalorder %s26, 1
      %p84 = por %p82, %p83
      %p86 = scmp.ne.s32.totalorder %s71, %s85
      %p87 = scmp.eq.s32.totalorder %s26, 0
      %p88 = por %p86, %p87
      %s89 = sadd.s32 %s27, %s28
      %s90 = sadd.s32 %s39, %s35
      %s91 = ssub.s32 %s89, %s90
      %p92 = scmp.eq.s32.totalorder %s91, 0
      %s94 = sadd.s32 %s93, 1
      %s95 = scalar_select %p92, %s93, %s94
      %p98 = pneg %p92
      %p99 = scmp.eq.s32.totalorder %s20, 1
      %p100 = por %p98, %p99
      %p101 = scmp.ne.s32.totalorder %s93, %s96
      %p102 = scmp.eq.s32.totalorder %s20, 0
      %p103 = por %p101, %p102
      %p104 = scmp.ne.s32.totalorder %s93, %s96
      %p105 = scmp.eq.s32.totalorder %s25, 1
      %p106 = por %p104, %p105
      %p107 = scmp.ne.s32.totalorder %s96, %s97
      %p108 = scmp.eq.s32.totalorder %s25, 0
      %p109 = por %p107, %p108
      %p110 = scmp.ne.s32.totalorder %s96, %s97
      %p111 = scmp.eq.s32.totalorder %s26, 1
      %p112 = por %p110, %p111
      %p114 = scmp.ne.s32.totalorder %s97, %s113
      %p115 = scmp.eq.s32.totalorder %s26, 0
      %p116 = por %p114, %p115
      %s117 = ssub.s32 %s27, %s39
      %p118 = scmp.eq.s32.totalorder %s117, 0
      %s120 = sadd.s32 %s119, 1
      %s121 = scalar_select %p118, %s119, %s120
      %p124 = pneg %p118
      %p125 = scmp.eq.s32.totalorder %s20, 1
      %p126 = por %p124, %p125
      %p127 = scmp.ne.s32.totalorder %s119, %s122
      %p128 = scmp.eq.s32.totalorder %s20, 0
      %p129 = por %p127, %p128
      %p130 = scmp.ne.s32.totalorder %s119, %s122
      %p131 = scmp.eq.s32.totalorder %s25, 1
      %p132 = por %p130, %p131
      %p133 = scmp.ne.s32.totalorder %s122, %s123
      %p134 = scmp.eq.s32.totalorder %s25, 0
      %p135 = por %p133, %p134
      %p136 = scmp.ne.s32.totalorder %s122, %s123
      %p137 = scmp.eq.s32.totalorder %s26, 1
      %p138 = por %p136, %p137
      %p140 = scmp.ne.s32.totalorder %s123, %s139
      %p141 = scmp.eq.s32.totalorder %s26, 0
      %p142 = por %p140, %p141
      %p143 = scmp.le.s32.totalorder 1, %s20
      %p144 = scmp.lt.s32.totalorder %s20, 3
      %p145 = pnand %p143, %p144
      %p146 = pneg %p145
      // Predicated region
      $region9: #{tpu_custom_call.1} parent=5 // pred_check
        _
      $region10: #{tpu_custom_call.1} parent=5 // pred_check_branch
        %148 = sbr.rel (%p145) target = $region12
      $region11: #{tpu_custom_call.1} parent=5 // pred_region
        %s149 = ssub.s32 %s20, 1
        // Predicated region
        $region13: #{tpu_custom_call.1} parent=11 // pred_check
          %p150 = pneg %p81
        $region14: #{tpu_custom_call.1} parent=11 // pred_check_branch
          %152 = sbr.rel (%p150) target = $region16
        $region15: #{tpu_custom_call.1} parent=11 // pred_region
          %154 = vsyncadd [#allocation6], 0
          %s155 = sshll.u32 %s1, 4
          %s156 = int_to_ptr.hbm [resolvable:$true] %s155
          %s157 = sshll.u32 [#allocation5], 4
          %s158 = int_to_ptr.vmem [resolvable:$true] %s157
          %163 = dma.hbm_to_vmem [thread:$0]  %s156, 512, %s158, [#allocation6], 64, 64, 4
        $region16: #{tpu_custom_call.1} parent=11 // pred_fallthru
          _
      $region12: #{tpu_custom_call.1} parent=5 // pred_fallthru
        _
      %p164 = scmp.lt.s32.totalorder %s20, 2
      // Predicated region
      $region17: #{tpu_custom_call.1} parent=5 // pred_check
        %p165 = pneg %p164
      $region18: #{tpu_custom_call.1} parent=5 // pred_check_branch
        %167 = sbr.rel (%p165) target = $region20
      $region19: #{tpu_custom_call.1} parent=5 // pred_region
        // Predicated region
        $region21: #{tpu_custom_call.1} parent=19 // pred_check
          %p168 = pneg %p54
        $region22: #{tpu_custom_call.1} parent=19 // pred_check_branch
          %170 = sbr.rel (%p168) target = $region24
        $region23: #{tpu_custom_call.1} parent=19 // pred_region
          %s171 = sand.u32 %s44, 1
          %s172 = scalar_lea.sflag [#allocation3], %s171
          %s173 = sand.u32 %s44, 1
          %s174 = smul.addr %s173, 1024
          %s175 = scalar_lea.vmem [#allocation2], %s174
          %s176 = sadd.s32 %s27, %s28
          %s177 = smul.u32 16, %s176
          %179 = vsyncadd %s172, 0
          %s180 = smul.addr %s177, 8
          %s181 = smul.addr %s180, 8
          %s182 = scalar_lea.hbm %s0, %s181
          %s183 = sshll.u32 %s182, 4
          %s184 = int_to_ptr.hbm [resolvable:$true] %s183
          %s185 = sshll.u32 %s175, 4
          %s186 = int_to_ptr.vmem [resolvable:$true] %s185
          %191 = dma.hbm_to_vmem [thread:$0]  %s184, 16384, %s186, %s172, 128, 128, 8
        $region24: #{tpu_custom_call.1} parent=19 // pred_fallthru
          _
      $region20: #{tpu_custom_call.1} parent=5 // pred_fallthru
        _
      %p192 = scmp.le.s32.totalorder 1, %s20
      %p193 = scmp.lt.s32.totalorder %s20, 3
      %p194 = pnand %p192, %p193
      %p195 = pneg %p194
      // Predicated region
      $region25: #{tpu_custom_call.1} parent=5 // pred_check
        _
      $region26: #{tpu_custom_call.1} parent=5 // pred_check_branch
        %197 = sbr.rel (%p194) target = $region28
      $region27: #{tpu_custom_call.1} parent=5 // pred_region
        %s198 = ssub.s32 %s20, 1
        %s199 = sand.u32 %s47, 1
        %s200 = scalar_lea.sflag [#allocation3], %s199
        %s201 = sand.u32 %s47, 1
        %s202 = smul.addr %s201, 1024
        %s203 = scalar_lea.vmem [#allocation2], %s202
        // Predicated region
        $region29: #{tpu_custom_call.1} parent=27 // pred_check
          %p204 = pneg %p60
        $region30: #{tpu_custom_call.1} parent=27 // pred_check_branch
          %206 = sbr.rel (%p204) target = $region32
        $region31: #{tpu_custom_call.1} parent=27 // pred_region
          %208 = dma.done %s200, 16384
        $region32: #{tpu_custom_call.1} parent=27 // pred_fallthru
          _
        // Predicated region
        $region33: #{tpu_custom_call.1} parent=27 // pred_check
          %p209 = pneg %p81
        $region34: #{tpu_custom_call.1} parent=27 // pred_check_branch
          %211 = sbr.rel (%p209) target = $region36
        $region35: #{tpu_custom_call.1} parent=27 // pred_region
          %213 = dma.done [#allocation6], 512
        $region36: #{tpu_custom_call.1} parent=27 // pred_fallthru
          _
        %s214 = sand.u32 %s47, 1
        %s215 = scalar_lea.sflag [#allocation3], %s214
        %s216 = sand.u32 %s47, 1
        %s217 = smul.addr %s216, 1024
        %s218 = scalar_lea.vmem [#allocation2], %s217
        %p219 = pneg %p60
        %p220 = pneg %p57
        %p221 = pneg %p81
        %p222 = pneg %p78
        %p223 = pneg %p109
        %p224 = pneg %p106
        %s225 = sand.u32 %s96, 1
        %s226 = scalar_lea.sflag [#allocation4], %s225
        %s227 = sand.u32 %s96, 1
        %s228 = smul.addr %s227, 8
        %s229 = scalar_lea.vmem [#allocation7], %s228
        %p230 = pneg %p135
        %p231 = pneg %p132
        %s232 = sand.u32 %s122, 1
        %s233 = scalar_lea.sflag [#allocation9], %s232
        %s234 = sand.u32 %s122, 1
        %s235 = smul.addr %s234, 2
        %s236 = scalar_lea.vmem [#allocation8], %s235
        %s237 = sadd.s32 %s29, %s30
        %s238 = smul.u32 16, %s237
        %s239 = sadd.s32 %s29, %s30
        %s240 = smul.u32 2, %s239
        %v242 = vld [vmem:[%s203] sm:$0xff]
        %v243 = vld [vmem:[%s203 + $0x8] sm:$0xff]
        %v244 = vld [vmem:[%s203 + $0x10] sm:$0xff]
        %v245 = vld [vmem:[%s203 + $0x18] sm:$0xff]
        %v246 = vld [vmem:[%s203 + $0x20] sm:$0xff]
        %v247 = vld [vmem:[%s203 + $0x28] sm:$0xff]
        %v248 = vld [vmem:[%s203 + $0x30] sm:$0xff]
        %v249 = vld [vmem:[%s203 + $0x38] sm:$0xff]
        %v250 = vld [vmem:[%s203 + $0x40] sm:$0xff]
        %v251 = vld [vmem:[%s203 + $0x48] sm:$0xff]
        %v252 = vld [vmem:[%s203 + $0x50] sm:$0xff]
        %v253 = vld [vmem:[%s203 + $0x58] sm:$0xff]
        %v254 = vld [vmem:[%s203 + $0x60] sm:$0xff]
        %v255 = vld [vmem:[%s203 + $0x68] sm:$0xff]
        %v256 = vld [vmem:[%s203 + $0x70] sm:$0xff]
        %v257 = vld [vmem:[%s203 + $0x78] sm:$0xff]
        %v258 = vld [vmem:[%s203 + $0x80] sm:$0xff]
        %v259 = vld [vmem:[%s203 + $0x88] sm:$0xff]
        %v260 = vld [vmem:[%s203 + $0x90] sm:$0xff]
        %v261 = vld [vmem:[%s203 + $0x98] sm:$0xff]
        %v262 = vld [vmem:[%s203 + $0xa0] sm:$0xff]
        %v263 = vld [vmem:[%s203 + $0xa8] sm:$0xff]
        %v264 = vld [vmem:[%s203 + $0xb0] sm:$0xff]
        %v265 = vld [vmem:[%s203 + $0xb8] sm:$0xff]
        %v266 = vld [vmem:[%s203 + $0xc0] sm:$0xff]
        %v267 = vld [vmem:[%s203 + $0xc8] sm:$0xff]
        %v268 = vld [vmem:[%s203 + $0xd0] sm:$0xff]
        %v269 = vld [vmem:[%s203 + $0xd8] sm:$0xff]
        %v270 = vld [vmem:[%s203 + $0xe0] sm:$0xff]
        %v271 = vld [vmem:[%s203 + $0xe8] sm:$0xff]
        %v272 = vld [vmem:[%s203 + $0xf0] sm:$0xff]
        %v273 = vld [vmem:[%s203 + $0xf8] sm:$0xff]
        %v274 = vld [vmem:[%s203 + $0x100] sm:$0xff]
        %v275 = vld [vmem:[%s203 + $0x108] sm:$0xff]
        %v276 = vld [vmem:[%s203 + $0x110] sm:$0xff]
        %v277 = vld [vmem:[%s203 + $0x118] sm:$0xff]
        %v278 = vld [vmem:[%s203 + $0x120] sm:$0xff]
        %v279 = vld [vmem:[%s203 + $0x128] sm:$0xff]
        %v280 = vld [vmem:[%s203 + $0x130] sm:$0xff]
        %v281 = vld [vmem:[%s203 + $0x138] sm:$0xff]
        %v282 = vld [vmem:[%s203 + $0x140] sm:$0xff]
        %v283 = vld [vmem:[%s203 + $0x148] sm:$0xff]
        %v284 = vld [vmem:[%s203 + $0x150] sm:$0xff]
        %v285 = vld [vmem:[%s203 + $0x158] sm:$0xff]
        %v286 = vld [vmem:[%s203 + $0x160] sm:$0xff]
        %v287 = vld [vmem:[%s203 + $0x168] sm:$0xff]
        %v288 = vld [vmem:[%s203 + $0x170] sm:$0xff]
        %v289 = vld [vmem:[%s203 + $0x178] sm:$0xff]
        %v290 = vld [vmem:[%s203 + $0x180] sm:$0xff]
        %v291 = vld [vmem:[%s203 + $0x188] sm:$0xff]
        %v292 = vld [vmem:[%s203 + $0x190] sm:$0xff]
        %v293 = vld [vmem:[%s203 + $0x198] sm:$0xff]
        %v294 = vld [vmem:[%s203 + $0x1a0] sm:$0xff]
        %v295 = vld [vmem:[%s203 + $0x1a8] sm:$0xff]
        %v296 = vld [vmem:[%s203 + $0x1b0] sm:$0xff]
        %v297 = vld [vmem:[%s203 + $0x1b8] sm:$0xff]
        %v298 = vld [vmem:[%s203 + $0x1c0] sm:$0xff]
        %v299 = vld [vmem:[%s203 + $0x1c8] sm:$0xff]
        %v300 = vld [vmem:[%s203 + $0x1d0] sm:$0xff]
        %v301 = vld [vmem:[%s203 + $0x1d8] sm:$0xff]
        %v302 = vld [vmem:[%s203 + $0x1e0] sm:$0xff]
        %v303 = vld [vmem:[%s203 + $0x1e8] sm:$0xff]
        %v304 = vld [vmem:[%s203 + $0x1f0] sm:$0xff]
        %v305 = vld [vmem:[%s203 + $0x1f8] sm:$0xff]
        %v306 = vld [vmem:[%s203 + $0x200] sm:$0xff]
        %v307 = vld [vmem:[%s203 + $0x208] sm:$0xff]
        %v308 = vld [vmem:[%s203 + $0x210] sm:$0xff]
        %v309 = vld [vmem:[%s203 + $0x218] sm:$0xff]
        %v310 = vld [vmem:[%s203 + $0x220] sm:$0xff]
        %v311 = vld [vmem:[%s203 + $0x228] sm:$0xff]
        %v312 = vld [vmem:[%s203 + $0x230] sm:$0xff]
        %v313 = vld [vmem:[%s203 + $0x238] sm:$0xff]
        %v314 = vld [vmem:[%s203 + $0x240] sm:$0xff]
        %v315 = vld [vmem:[%s203 + $0x248] sm:$0xff]
        %v316 = vld [vmem:[%s203 + $0x250] sm:$0xff]
        %v317 = vld [vmem:[%s203 + $0x258] sm:$0xff]
        %v318 = vld [vmem:[%s203 + $0x260] sm:$0xff]
        %v319 = vld [vmem:[%s203 + $0x268] sm:$0xff]
        %v320 = vld [vmem:[%s203 + $0x270] sm:$0xff]
        %v321 = vld [vmem:[%s203 + $0x278] sm:$0xff]
        %v322 = vld [vmem:[%s203 + $0x280] sm:$0xff]
        %v323 = vld [vmem:[%s203 + $0x288] sm:$0xff]
        %v324 = vld [vmem:[%s203 + $0x290] sm:$0xff]
        %v325 = vld [vmem:[%s203 + $0x298] sm:$0xff]
        %v326 = vld [vmem:[%s203 + $0x2a0] sm:$0xff]
        %v327 = vld [vmem:[%s203 + $0x2a8] sm:$0xff]
        %v328 = vld [vmem:[%s203 + $0x2b0] sm:$0xff]
        %v329 = vld [vmem:[%s203 + $0x2b8] sm:$0xff]
        %v330 = vld [vmem:[%s203 + $0x2c0] sm:$0xff]
        %v331 = vld [vmem:[%s203 + $0x2c8] sm:$0xff]
        %v332 = vld [vmem:[%s203 + $0x2d0] sm:$0xff]
        %v333 = vld [vmem:[%s203 + $0x2d8] sm:$0xff]
        %v334 = vld [vmem:[%s203 + $0x2e0] sm:$0xff]
        %v335 = vld [vmem:[%s203 + $0x2e8] sm:$0xff]
        %v336 = vld [vmem:[%s203 + $0x2f0] sm:$0xff]
        %v337 = vld [vmem:[%s203 + $0x2f8] sm:$0xff]
        %v338 = vld [vmem:[%s203 + $0x300] sm:$0xff]
        %v339 = vld [vmem:[%s203 + $0x308] sm:$0xff]
        %v340 = vld [vmem:[%s203 + $0x310] sm:$0xff]
        %v341 = vld [vmem:[%s203 + $0x318] sm:$0xff]
        %v342 = vld [vmem:[%s203 + $0x320] sm:$0xff]
        %v343 = vld [vmem:[%s203 + $0x328] sm:$0xff]
        %v344 = vld [vmem:[%s203 + $0x330] sm:$0xff]
        %v345 = vld [vmem:[%s203 + $0x338] sm:$0xff]
        %v346 = vld [vmem:[%s203 + $0x340] sm:$0xff]
        %v347 = vld [vmem:[%s203 + $0x348] sm:$0xff]
        %v348 = vld [vmem:[%s203 + $0x350] sm:$0xff]
        %v349 = vld [vmem:[%s203 + $0x358] sm:$0xff]
        %v350 = vld [vmem:[%s203 + $0x360] sm:$0xff]
        %v351 = vld [vmem:[%s203 + $0x368] sm:$0xff]
        %v352 = vld [vmem:[%s203 + $0x370] sm:$0xff]
        %v353 = vld [vmem:[%s203 + $0x378] sm:$0xff]
        %v354 = vld [vmem:[%s203 + $0x380] sm:$0xff]
        %v355 = vld [vmem:[%s203 + $0x388] sm:$0xff]
        %v356 = vld [vmem:[%s203 + $0x390] sm:$0xff]
        %v357 = vld [vmem:[%s203 + $0x398] sm:$0xff]
        %v358 = vld [vmem:[%s203 + $0x3a0] sm:$0xff]
        %v359 = vld [vmem:[%s203 + $0x3a8] sm:$0xff]
        %v360 = vld [vmem:[%s203 + $0x3b0] sm:$0xff]
        %v361 = vld [vmem:[%s203 + $0x3b8] sm:$0xff]
        %v362 = vld [vmem:[%s203 + $0x3c0] sm:$0xff]
        %v363 = vld [vmem:[%s203 + $0x3c8] sm:$0xff]
        %v364 = vld [vmem:[%s203 + $0x3d0] sm:$0xff]
        %v365 = vld [vmem:[%s203 + $0x3d8] sm:$0xff]
        %v366 = vld [vmem:[%s203 + $0x3e0] sm:$0xff]
        %v367 = vld [vmem:[%s203 + $0x3e8] sm:$0xff]
        %v368 = vld [vmem:[%s203 + $0x3f0] sm:$0xff]
        %v369 = vld [vmem:[%s203 + $0x3f8] sm:$0xff]
        %vm370 = vcmask 523264
        %v371 = vsel %vm370, %v242, 0.0
        %372 = vadd.xlane.f32.xlu0 %v371
        %v373 = vpop.xlane.xlu0 %372
        %v374 = vsel %vm370, %v243, 0.0
        %375 = vadd.xlane.f32.xlu0 %v374
        %v376 = vpop.xlane.xlu0 %375
        %v377 = vsel %vm370, %v244, 0.0
        %378 = vadd.xlane.f32.xlu0 %v377
        %v379 = vpop.xlane.xlu0 %378
        %v380 = vsel %vm370, %v245, 0.0
        %381 = vadd.xlane.f32.xlu0 %v380
        %v382 = vpop.xlane.xlu0 %381
        %v383 = vsel %vm370, %v246, 0.0
        %384 = vadd.xlane.f32.xlu0 %v383
        %v385 = vpop.xlane.xlu0 %384
        %v386 = vsel %vm370, %v247, 0.0
        %387 = vadd.xlane.f32.xlu0 %v386
        %v388 = vpop.xlane.xlu0 %387
        %v389 = vsel %vm370, %v248, 0.0
        %390 = vadd.xlane.f32.xlu0 %v389
        %v391 = vpop.xlane.xlu0 %390
        %v392 = vsel %vm370, %v249, 0.0
        %393 = vadd.xlane.f32.xlu0 %v392
        %v394 = vpop.xlane.xlu0 %393
        %v395 = vsel %vm370, %v250, 0.0
        %396 = vadd.xlane.f32.xlu0 %v395
        %v397 = vpop.xlane.xlu0 %396
        %v398 = vsel %vm370, %v251, 0.0
        %399 = vadd.xlane.f32.xlu0 %v398
        %v400 = vpop.xlane.xlu0 %399
        %v401 = vsel %vm370, %v252, 0.0
        %402 = vadd.xlane.f32.xlu0 %v401
        %v403 = vpop.xlane.xlu0 %402
        %v404 = vsel %vm370, %v253, 0.0
        %405 = vadd.xlane.f32.xlu0 %v404
        %v406 = vpop.xlane.xlu0 %405
        %v407 = vsel %vm370, %v254, 0.0
        %408 = vadd.xlane.f32.xlu0 %v407
        %v409 = vpop.xlane.xlu0 %408
        %v410 = vsel %vm370, %v255, 0.0
        %411 = vadd.xlane.f32.xlu0 %v410
        %v412 = vpop.xlane.xlu0 %411
        %v413 = vsel %vm370, %v256, 0.0
        %414 = vadd.xlane.f32.xlu0 %v413
        %v415 = vpop.xlane.xlu0 %414
        %v416 = vsel %vm370, %v257, 0.0
        %417 = vadd.xlane.f32.xlu0 %v416
        %v418 = vpop.xlane.xlu0 %417
        %v419 = vsel %vm370, %v258, 0.0
        %420 = vadd.xlane.f32.xlu0 %v419
        %v421 = vpop.xlane.xlu0 %420
        %v422 = vsel %vm370, %v259, 0.0
        %423 = vadd.xlane.f32.xlu0 %v422
        %v424 = vpop.xlane.xlu0 %423
        %v425 = vsel %vm370, %v260, 0.0
        %426 = vadd.xlane.f32.xlu0 %v425
        %v427 = vpop.xlane.xlu0 %426
        %v428 = vsel %vm370, %v261, 0.0
        %429 = vadd.xlane.f32.xlu0 %v428
        %v430 = vpop.xlane.xlu0 %429
        %v431 = vsel %vm370, %v262, 0.0
        %432 = vadd.xlane.f32.xlu0 %v431
        %v433 = vpop.xlane.xlu0 %432
        %v434 = vsel %vm370, %v263, 0.0
        %435 = vadd.xlane.f32.xlu0 %v434
        %v436 = vpop.xlane.xlu0 %435
        %v437 = vsel %vm370, %v264, 0.0
        %438 = vadd.xlane.f32.xlu0 %v437
        %v439 = vpop.xlane.xlu0 %438
        %v440 = vsel %vm370, %v265, 0.0
        %441 = vadd.xlane.f32.xlu0 %v440
        %v442 = vpop.xlane.xlu0 %441
        %v443 = vsel %vm370, %v266, 0.0
        %444 = vadd.xlane.f32.xlu0 %v443
        %v445 = vpop.xlane.xlu0 %444
        %v446 = vsel %vm370, %v267, 0.0
        %447 = vadd.xlane.f32.xlu0 %v446
        %v448 = vpop.xlane.xlu0 %447
        %v449 = vsel %vm370, %v268, 0.0
        %450 = vadd.xlane.f32.xlu0 %v449
        %v451 = vpop.xlane.xlu0 %450
        %v452 = vsel %vm370, %v269, 0.0
        %453 = vadd.xlane.f32.xlu0 %v452
        %v454 = vpop.xlane.xlu0 %453
        %v455 = vsel %vm370, %v270, 0.0
        %456 = vadd.xlane.f32.xlu0 %v455
        %v457 = vpop.xlane.xlu0 %456
        %v458 = vsel %vm370, %v271, 0.0
        %459 = vadd.xlane.f32.xlu0 %v458
        %v460 = vpop.xlane.xlu0 %459
        %v461 = vsel %vm370, %v272, 0.0
        %462 = vadd.xlane.f32.xlu0 %v461
        %v463 = vpop.xlane.xlu0 %462
        %v464 = vsel %vm370, %v273, 0.0
        %465 = vadd.xlane.f32.xlu0 %v464
        %v466 = vpop.xlane.xlu0 %465
        %v467 = vsel %vm370, %v274, 0.0
        %468 = vadd.xlane.f32.xlu0 %v467
        %v469 = vpop.xlane.xlu0 %468
        %v470 = vsel %vm370, %v275, 0.0
        %471 = vadd.xlane.f32.xlu0 %v470
        %v472 = vpop.xlane.xlu0 %471
        %v473 = vsel %vm370, %v276, 0.0
        %474 = vadd.xlane.f32.xlu0 %v473
        %v475 = vpop.xlane.xlu0 %474
        %v476 = vsel %vm370, %v277, 0.0
        %477 = vadd.xlane.f32.xlu0 %v476
        %v478 = vpop.xlane.xlu0 %477
        %v479 = vsel %vm370, %v278, 0.0
        %480 = vadd.xlane.f32.xlu0 %v479
        %v481 = vpop.xlane.xlu0 %480
        %v482 = vsel %vm370, %v279, 0.0
        %483 = vadd.xlane.f32.xlu0 %v482
        %v484 = vpop.xlane.xlu0 %483
        %v485 = vsel %vm370, %v280, 0.0
        %486 = vadd.xlane.f32.xlu0 %v485
        %v487 = vpop.xlane.xlu0 %486
        %v488 = vsel %vm370, %v281, 0.0
        %489 = vadd.xlane.f32.xlu0 %v488
        %v490 = vpop.xlane.xlu0 %489
        %v491 = vsel %vm370, %v282, 0.0
        %492 = vadd.xlane.f32.xlu0 %v491
        %v493 = vpop.xlane.xlu0 %492
        %v494 = vsel %vm370, %v283, 0.0
        %495 = vadd.xlane.f32.xlu0 %v494
        %v496 = vpop.xlane.xlu0 %495
        %v497 = vsel %vm370, %v284, 0.0
        %498 = vadd.xlane.f32.xlu0 %v497
        %v499 = vpop.xlane.xlu0 %498
        %v500 = vsel %vm370, %v285, 0.0
        %501 = vadd.xlane.f32.xlu0 %v500
        %v502 = vpop.xlane.xlu0 %501
        %v503 = vsel %vm370, %v286, 0.0
        %504 = vadd.xlane.f32.xlu0 %v503
        %v505 = vpop.xlane.xlu0 %504
        %v506 = vsel %vm370, %v287, 0.0
        %507 = vadd.xlane.f32.xlu0 %v506
        %v508 = vpop.xlane.xlu0 %507
        %v509 = vsel %vm370, %v288, 0.0
        %510 = vadd.xlane.f32.xlu0 %v509
        %v511 = vpop.xlane.xlu0 %510
        %v512 = vsel %vm370, %v289, 0.0
        %513 = vadd.xlane.f32.xlu0 %v512
        %v514 = vpop.xlane.xlu0 %513
        %v515 = vsel %vm370, %v290, 0.0
        %516 = vadd.xlane.f32.xlu0 %v515
        %v517 = vpop.xlane.xlu0 %516
        %v518 = vsel %vm370, %v291, 0.0
        %519 = vadd.xlane.f32.xlu0 %v518
        %v520 = vpop.xlane.xlu0 %519
        %v521 = vsel %vm370, %v292, 0.0
        %522 = vadd.xlane.f32.xlu0 %v521
        %v523 = vpop.xlane.xlu0 %522
        %v524 = vsel %vm370, %v293, 0.0
        %525 = vadd.xlane.f32.xlu0 %v524
        %v526 = vpop.xlane.xlu0 %525
        %v527 = vsel %vm370, %v294, 0.0
        %528 = vadd.xlane.f32.xlu0 %v527
        %v529 = vpop.xlane.xlu0 %528
        %v530 = vsel %vm370, %v295, 0.0
        %531 = vadd.xlane.f32.xlu0 %v530
        %v532 = vpop.xlane.xlu0 %531
        %v533 = vsel %vm370, %v296, 0.0
        %534 = vadd.xlane.f32.xlu0 %v533
        %v535 = vpop.xlane.xlu0 %534
        %v536 = vsel %vm370, %v297, 0.0
        %537 = vadd.xlane.f32.xlu0 %v536
        %v538 = vpop.xlane.xlu0 %537
        %v539 = vsel %vm370, %v298, 0.0
        %540 = vadd.xlane.f32.xlu0 %v539
        %v541 = vpop.xlane.xlu0 %540
        %v542 = vsel %vm370, %v299, 0.0
        %543 = vadd.xlane.f32.xlu0 %v542
        %v544 = vpop.xlane.xlu0 %543
        %v545 = vsel %vm370, %v300, 0.0
        %546 = vadd.xlane.f32.xlu0 %v545
        %v547 = vpop.xlane.xlu0 %546
        %v548 = vsel %vm370, %v301, 0.0
        %549 = vadd.xlane.f32.xlu0 %v548
        %v550 = vpop.xlane.xlu0 %549
        %v551 = vsel %vm370, %v302, 0.0
        %552 = vadd.xlane.f32.xlu0 %v551
        %v553 = vpop.xlane.xlu0 %552
        %v554 = vsel %vm370, %v303, 0.0
        %555 = vadd.xlane.f32.xlu0 %v554
        %v556 = vpop.xlane.xlu0 %555
        %v557 = vsel %vm370, %v304, 0.0
        %558 = vadd.xlane.f32.xlu0 %v557
        %v559 = vpop.xlane.xlu0 %558
        %v560 = vsel %vm370, %v305, 0.0
        %561 = vadd.xlane.f32.xlu0 %v560
        %v562 = vpop.xlane.xlu0 %561
        %v563 = vsel %vm370, %v306, 0.0
        %564 = vadd.xlane.f32.xlu0 %v563
        %v565 = vpop.xlane.xlu0 %564
        %v566 = vsel %vm370, %v307, 0.0
        %567 = vadd.xlane.f32.xlu0 %v566
        %v568 = vpop.xlane.xlu0 %567
        %v569 = vsel %vm370, %v308, 0.0
        %570 = vadd.xlane.f32.xlu0 %v569
        %v571 = vpop.xlane.xlu0 %570
        %v572 = vsel %vm370, %v309, 0.0
        %573 = vadd.xlane.f32.xlu0 %v572
        %v574 = vpop.xlane.xlu0 %573
        %v575 = vsel %vm370, %v310, 0.0
        %576 = vadd.xlane.f32.xlu0 %v575
        %v577 = vpop.xlane.xlu0 %576
        %v578 = vsel %vm370, %v311, 0.0
        %579 = vadd.xlane.f32.xlu0 %v578
        %v580 = vpop.xlane.xlu0 %579
        %v581 = vsel %vm370, %v312, 0.0
        %582 = vadd.xlane.f32.xlu0 %v581
        %v583 = vpop.xlane.xlu0 %582
        %v584 = vsel %vm370, %v313, 0.0
        %585 = vadd.xlane.f32.xlu0 %v584
        %v586 = vpop.xlane.xlu0 %585
        %v587 = vsel %vm370, %v314, 0.0
        %588 = vadd.xlane.f32.xlu0 %v587
        %v589 = vpop.xlane.xlu0 %588
        %v590 = vsel %vm370, %v315, 0.0
        %591 = vadd.xlane.f32.xlu0 %v590
        %v592 = vpop.xlane.xlu0 %591
        %v593 = vsel %vm370, %v316, 0.0
        %594 = vadd.xlane.f32.xlu0 %v593
        %v595 = vpop.xlane.xlu0 %594
        %v596 = vsel %vm370, %v317, 0.0
        %597 = vadd.xlane.f32.xlu0 %v596
        %v598 = vpop.xlane.xlu0 %597
        %v599 = vsel %vm370, %v318, 0.0
        %600 = vadd.xlane.f32.xlu0 %v599
        %v601 = vpop.xlane.xlu0 %600
        %v602 = vsel %vm370, %v319, 0.0
        %603 = vadd.xlane.f32.xlu0 %v602
        %v604 = vpop.xlane.xlu0 %603
        %v605 = vsel %vm370, %v320, 0.0
        %606 = vadd.xlane.f32.xlu0 %v605
        %v607 = vpop.xlane.xlu0 %606
        %v608 = vsel %vm370, %v321, 0.0
        %609 = vadd.xlane.f32.xlu0 %v608
        %v610 = vpop.xlane.xlu0 %609
        %v611 = vsel %vm370, %v322, 0.0
        %612 = vadd.xlane.f32.xlu0 %v611
        %v613 = vpop.xlane.xlu0 %612
        %v614 = vsel %vm370, %v323, 0.0
        %615 = vadd.xlane.f32.xlu0 %v614
        %v616 = vpop.xlane.xlu0 %615
        %v617 = vsel %vm370, %v324, 0.0
        %618 = vadd.xlane.f32.xlu0 %v617
        %v619 = vpop.xlane.xlu0 %618
        %v620 = vsel %vm370, %v325, 0.0
        %621 = vadd.xlane.f32.xlu0 %v620
        %v622 = vpop.xlane.xlu0 %621
        %v623 = vsel %vm370, %v326, 0.0
        %624 = vadd.xlane.f32.xlu0 %v623
        %v625 = vpop.xlane.xlu0 %624
        %v626 = vsel %vm370, %v327, 0.0
        %627 = vadd.xlane.f32.xlu0 %v626
        %v628 = vpop.xlane.xlu0 %627
        %v629 = vsel %vm370, %v328, 0.0
        %630 = vadd.xlane.f32.xlu0 %v629
        %v631 = vpop.xlane.xlu0 %630
        %v632 = vsel %vm370, %v329, 0.0
        %633 = vadd.xlane.f32.xlu0 %v632
        %v634 = vpop.xlane.xlu0 %633
        %v635 = vsel %vm370, %v330, 0.0
        %636 = vadd.xlane.f32.xlu0 %v635
        %v637 = vpop.xlane.xlu0 %636
        %v638 = vsel %vm370, %v331, 0.0
        %639 = vadd.xlane.f32.xlu0 %v638
        %v640 = vpop.xlane.xlu0 %639
        %v641 = vsel %vm370, %v332, 0.0
        %642 = vadd.xlane.f32.xlu0 %v641
        %v643 = vpop.xlane.xlu0 %642
        %v644 = vsel %vm370, %v333, 0.0
        %645 = vadd.xlane.f32.xlu0 %v644
        %v646 = vpop.xlane.xlu0 %645
        %v647 = vsel %vm370, %v334, 0.0
        %648 = vadd.xlane.f32.xlu0 %v647
        %v649 = vpop.xlane.xlu0 %648
        %v650 = vsel %vm370, %v335, 0.0
        %651 = vadd.xlane.f32.xlu0 %v650
        %v652 = vpop.xlane.xlu0 %651
        %v653 = vsel %vm370, %v336, 0.0
        %654 = vadd.xlane.f32.xlu0 %v653
        %v655 = vpop.xlane.xlu0 %654
        %v656 = vsel %vm370, %v337, 0.0
        %657 = vadd.xlane.f32.xlu0 %v656
        %v658 = vpop.xlane.xlu0 %657
        %v659 = vsel %vm370, %v338, 0.0
        %660 = vadd.xlane.f32.xlu0 %v659
        %v661 = vpop.xlane.xlu0 %660
        %v662 = vsel %vm370, %v339, 0.0
        %663 = vadd.xlane.f32.xlu0 %v662
        %v664 = vpop.xlane.xlu0 %663
        %v665 = vsel %vm370, %v340, 0.0
        %666 = vadd.xlane.f32.xlu0 %v665
        %v667 = vpop.xlane.xlu0 %666
        %v668 = vsel %vm370, %v341, 0.0
        %669 = vadd.xlane.f32.xlu0 %v668
        %v670 = vpop.xlane.xlu0 %669
        %v671 = vsel %vm370, %v342, 0.0
        %672 = vadd.xlane.f32.xlu0 %v671
        %v673 = vpop.xlane.xlu0 %672
        %v674 = vsel %vm370, %v343, 0.0
        %675 = vadd.xlane.f32.xlu0 %v674
        %v676 = vpop.xlane.xlu0 %675
        %v677 = vsel %vm370, %v344, 0.0
        %678 = vadd.xlane.f32.xlu0 %v677
        %v679 = vpop.xlane.xlu0 %678
        %v680 = vsel %vm370, %v345, 0.0
        %681 = vadd.xlane.f32.xlu0 %v680
        %v682 = vpop.xlane.xlu0 %681
        %v683 = vsel %vm370, %v346, 0.0
        %684 = vadd.xlane.f32.xlu0 %v683
        %v685 = vpop.xlane.xlu0 %684
        %v686 = vsel %vm370, %v347, 0.0
        %687 = vadd.xlane.f32.xlu0 %v686
        %v688 = vpop.xlane.xlu0 %687
        %v689 = vsel %vm370, %v348, 0.0
        %690 = vadd.xlane.f32.xlu0 %v689
        %v691 = vpop.xlane.xlu0 %690
        %v692 = vsel %vm370, %v349, 0.0
        %693 = vadd.xlane.f32.xlu0 %v692
        %v694 = vpop.xlane.xlu0 %693
        %v695 = vsel %vm370, %v350, 0.0
        %696 = vadd.xlane.f32.xlu0 %v695
        %v697 = vpop.xlane.xlu0 %696
        %v698 = vsel %vm370, %v351, 0.0
        %699 = vadd.xlane.f32.xlu0 %v698
        %v700 = vpop.xlane.xlu0 %699
        %v701 = vsel %vm370, %v352, 0.0
        %702 = vadd.xlane.f32.xlu0 %v701
        %v703 = vpop.xlane.xlu0 %702
        %v704 = vsel %vm370, %v353, 0.0
        %705 = vadd.xlane.f32.xlu0 %v704
        %v706 = vpop.xlane.xlu0 %705
        %v707 = vsel %vm370, %v354, 0.0
        %708 = vadd.xlane.f32.xlu0 %v707
        %v709 = vpop.xlane.xlu0 %708
        %v710 = vsel %vm370, %v355, 0.0
        %711 = vadd.xlane.f32.xlu0 %v710
        %v712 = vpop.xlane.xlu0 %711
        %v713 = vsel %vm370, %v356, 0.0
        %714 = vadd.xlane.f32.xlu0 %v713
        %v715 = vpop.xlane.xlu0 %714
        %v716 = vsel %vm370, %v357, 0.0
        %717 = vadd.xlane.f32.xlu0 %v716
        %v718 = vpop.xlane.xlu0 %717
        %v719 = vsel %vm370, %v358, 0.0
        %720 = vadd.xlane.f32.xlu0 %v719
        %v721 = vpop.xlane.xlu0 %720
        %v722 = vsel %vm370, %v359, 0.0
        %723 = vadd.xlane.f32.xlu0 %v722
        %v724 = vpop.xlane.xlu0 %723
        %v725 = vsel %vm370, %v360, 0.0
        %726 = vadd.xlane.f32.xlu0 %v725
        %v727 = vpop.xlane.xlu0 %726
        %v728 = vsel %vm370, %v361, 0.0
        %729 = vadd.xlane.f32.xlu0 %v728
        %v730 = vpop.xlane.xlu0 %729
        %v731 = vsel %vm370, %v362, 0.0
        %732 = vadd.xlane.f32.xlu0 %v731
        %v733 = vpop.xlane.xlu0 %732
        %v734 = vsel %vm370, %v363, 0.0
        %735 = vadd.xlane.f32.xlu0 %v734
        %v736 = vpop.xlane.xlu0 %735
        %v737 = vsel %vm370, %v364, 0.0
        %738 = vadd.xlane.f32.xlu0 %v737
        %v739 = vpop.xlane.xlu0 %738
        %v740 = vsel %vm370, %v365, 0.0
        %741 = vadd.xlane.f32.xlu0 %v740
        %v742 = vpop.xlane.xlu0 %741
        %v743 = vsel %vm370, %v366, 0.0
        %744 = vadd.xlane.f32.xlu0 %v743
        %v745 = vpop.xlane.xlu0 %744
        %v746 = vsel %vm370, %v367, 0.0
        %747 = vadd.xlane.f32.xlu0 %v746
        %v748 = vpop.xlane.xlu0 %747
        %v749 = vsel %vm370, %v368, 0.0
        %750 = vadd.xlane.f32.xlu0 %v749
        %v751 = vpop.xlane.xlu0 %750
        %v752 = vsel %vm370, %v369, 0.0
        %753 = vadd.xlane.f32.xlu0 %v752
        %v754 = vpop.xlane.xlu0 %753
        %v755 = vpack.c.bf16 %v376, %v373
        %v756 = vpack.c.bf16 %v382, %v379
        %v757 = vpack.c.bf16 %v388, %v385
        %v758 = vpack.c.bf16 %v394, %v391
        %v759 = vpack.c.bf16 %v400, %v397
        %v760 = vpack.c.bf16 %v406, %v403
        %v761 = vpack.c.bf16 %v412, %v409
        %v762 = vpack.c.bf16 %v418, %v415
        %v763 = vpack.c.bf16 %v424, %v421
        %v764 = vpack.c.bf16 %v430, %v427
        %v765 = vpack.c.bf16 %v436, %v433
        %v766 = vpack.c.bf16 %v442, %v439
        %v767 = vpack.c.bf16 %v448, %v445
        %v768 = vpack.c.bf16 %v454, %v451
        %v769 = vpack.c.bf16 %v460, %v457
        %v770 = vpack.c.bf16 %v466, %v463
        %v771 = vpack.c.bf16 %v472, %v469
        %v772 = vpack.c.bf16 %v478, %v475
        %v773 = vpack.c.bf16 %v484, %v481
        %v774 = vpack.c.bf16 %v490, %v487
        %v775 = vpack.c.bf16 %v496, %v493
        %v776 = vpack.c.bf16 %v502, %v499
        %v777 = vpack.c.bf16 %v508, %v505
        %v778 = vpack.c.bf16 %v514, %v511
        %v779 = vpack.c.bf16 %v520, %v517
        %v780 = vpack.c.bf16 %v526, %v523
        %v781 = vpack.c.bf16 %v532, %v529
        %v782 = vpack.c.bf16 %v538, %v535
        %v783 = vpack.c.bf16 %v544, %v541
        %v784 = vpack.c.bf16 %v550, %v547
        %v785 = vpack.c.bf16 %v556, %v553
        %v786 = vpack.c.bf16 %v562, %v559
        %v787 = vpack.c.bf16 %v568, %v565
        %v788 = vpack.c.bf16 %v574, %v571
        %v789 = vpack.c.bf16 %v580, %v577
        %v790 = vpack.c.bf16 %v586, %v583
        %v791 = vpack.c.bf16 %v592, %v589
        %v792 = vpack.c.bf16 %v598, %v595
        %v793 = vpack.c.bf16 %v604, %v601
        %v794 = vpack.c.bf16 %v610, %v607
        %v795 = vpack.c.bf16 %v616, %v613
        %v796 = vpack.c.bf16 %v622, %v619
        %v797 = vpack.c.bf16 %v628, %v625
        %v798 = vpack.c.bf16 %v634, %v631
        %v799 = vpack.c.bf16 %v640, %v637
        %v800 = vpack.c.bf16 %v646, %v643
        %v801 = vpack.c.bf16 %v652, %v649
        %v802 = vpack.c.bf16 %v658, %v655
        %v803 = vpack.c.bf16 %v664, %v661
        %v804 = vpack.c.bf16 %v670, %v667
        %v805 = vpack.c.bf16 %v676, %v673
        %v806 = vpack.c.bf16 %v682, %v679
        %v807 = vpack.c.bf16 %v688, %v685
        %v808 = vpack.c.bf16 %v694, %v691
        %v809 = vpack.c.bf16 %v700, %v697
        %v810 = vpack.c.bf16 %v706, %v703
        %v811 = vpack.c.bf16 %v712, %v709
        %v812 = vpack.c.bf16 %v718, %v715
        %v813 = vpack.c.bf16 %v724, %v721
        %v814 = vpack.c.bf16 %v730, %v727
        %v815 = vpack.c.bf16 %v736, %v733
        %v816 = vpack.c.bf16 %v742, %v739
        %v817 = vpack.c.bf16 %v748, %v745
        %v818 = vpack.c.bf16 %v754, %v751
        %v819 = vld [vmem:[#allocation5] sm:$0xf]
        %v820 = vld [vmem:[#allocation5 + $0x4] sm:$0xf]
        %v821 = vld [vmem:[#allocation5 + $0x8] sm:$0xf]
        %v822 = vld [vmem:[#allocation5 + $0xc] sm:$0xf]
        %v823 = vld [vmem:[#allocation5 + $0x10] sm:$0xf]
        %v824 = vld [vmem:[#allocation5 + $0x14] sm:$0xf]
        %v825 = vld [vmem:[#allocation5 + $0x18] sm:$0xf]
        %v826 = vld [vmem:[#allocation5 + $0x1c] sm:$0xf]
        %v891 = vunpack.c.l.b16 %v755
        %v892 = vunpack.c.h.b16 %v755
        %v893 = vunpack.c.l.b16 %v756
        %v894 = vunpack.c.h.b16 %v756
        %v895 = vunpack.c.l.b16 %v757
        %v896 = vunpack.c.h.b16 %v757
        %v897 = vunpack.c.l.b16 %v758
        %v898 = vunpack.c.h.b16 %v758
        %v899 = vunpack.c.l.b16 %v759
        %v900 = vunpack.c.h.b16 %v759
        %v901 = vunpack.c.l.b16 %v760
        %v902 = vunpack.c.h.b16 %v760
        %v903 = vunpack.c.l.b16 %v761
        %v904 = vunpack.c.h.b16 %v761
        %v905 = vunpack.c.l.b16 %v762
        %v906 = vunpack.c.h.b16 %v762
        %v907 = vunpack.c.l.b16 %v763
        %v908 = vunpack.c.h.b16 %v763
        %v909 = vunpack.c.l.b16 %v764
        %v910 = vunpack.c.h.b16 %v764
        %v911 = vunpack.c.l.b16 %v765
        %v912 = vunpack.c.h.b16 %v765
        %v913 = vunpack.c.l.b16 %v766
        %v914 = vunpack.c.h.b16 %v766
        %v915 = vunpack.c.l.b16 %v767
        %v916 = vunpack.c.h.b16 %v767
        %v917 = vunpack.c.l.b16 %v768
        %v918 = vunpack.c.h.b16 %v768
        %v919 = vunpack.c.l.b16 %v769
        %v920 = vunpack.c.h.b16 %v769
        %v921 = vunpack.c.l.b16 %v770
        %v922 = vunpack.c.h.b16 %v770
        %v923 = vunpack.c.l.b16 %v771
        %v924 = vunpack.c.h.b16 %v771
        %v925 = vunpack.c.l.b16 %v772
        %v926 = vunpack.c.h.b16 %v772
        %v927 = vunpack.c.l.b16 %v773
        %v928 = vunpack.c.h.b16 %v773
        %v929 = vunpack.c.l.b16 %v774
        %v930 = vunpack.c.h.b16 %v774
        %v931 = vunpack.c.l.b16 %v775
        %v932 = vunpack.c.h.b16 %v775
        %v933 = vunpack.c.l.b16 %v776
        %v934 = vunpack.c.h.b16 %v776
        %v935 = vunpack.c.l.b16 %v777
        %v936 = vunpack.c.h.b16 %v777
        %v937 = vunpack.c.l.b16 %v778
        %v938 = vunpack.c.h.b16 %v778
        %v939 = vunpack.c.l.b16 %v779
        %v940 = vunpack.c.h.b16 %v779
        %v941 = vunpack.c.l.b16 %v780
        %v942 = vunpack.c.h.b16 %v780
        %v943 = vunpack.c.l.b16 %v781
        %v944 = vunpack.c.h.b16 %v781
        %v945 = vunpack.c.l.b16 %v782
        %v946 = vunpack.c.h.b16 %v782
        %v947 = vunpack.c.l.b16 %v783
        %v948 = vunpack.c.h.b16 %v783
        %v949 = vunpack.c.l.b16 %v784
        %v950 = vunpack.c.h.b16 %v784
        %v951 = vunpack.c.l.b16 %v785
        %v952 = vunpack.c.h.b16 %v785
        %v953 = vunpack.c.l.b16 %v786
        %v954 = vunpack.c.h.b16 %v786
        %v955 = vunpack.c.l.b16 %v787
        %v956 = vunpack.c.h.b16 %v787
        %v957 = vunpack.c.l.b16 %v788
        %v958 = vunpack.c.h.b16 %v788
        %v959 = vunpack.c.l.b16 %v789
        %v960 = vunpack.c.h.b16 %v789
        %v961 = vunpack.c.l.b16 %v790
        %v962 = vunpack.c.h.b16 %v790
        %v963 = vunpack.c.l.b16 %v791
        %v964 = vunpack.c.h.b16 %v791
        %v965 = vunpack.c.l.b16 %v792
        %v966 = vunpack.c.h.b16 %v792
        %v967 = vunpack.c.l.b16 %v793
        %v968 = vunpack.c.h.b16 %v793
        %v969 = vunpack.c.l.b16 %v794
        %v970 = vunpack.c.h.b16 %v794
        %v971 = vunpack.c.l.b16 %v795
        %v972 = vunpack.c.h.b16 %v795
        %v973 = vunpack.c.l.b16 %v796
        %v974 = vunpack.c.h.b16 %v796
        %v975 = vunpack.c.l.b16 %v797
        %v976 = vunpack.c.h.b16 %v797
        %v977 = vunpack.c.l.b16 %v798
        %v978 = vunpack.c.h.b16 %v798
        %v979 = vunpack.c.l.b16 %v799
        %v980 = vunpack.c.h.b16 %v799
        %v981 = vunpack.c.l.b16 %v800
        %v982 = vunpack.c.h.b16 %v800
        %v983 = vunpack.c.l.b16 %v801
        %v984 = vunpack.c.h.b16 %v801
        %v985 = vunpack.c.l.b16 %v802
        %v986 = vunpack.c.h.b16 %v802
        %v987 = vunpack.c.l.b16 %v803
        %v988 = vunpack.c.h.b16 %v803
        %v989 = vunpack.c.l.b16 %v804
        %v990 = vunpack.c.h.b16 %v804
        %v991 = vunpack.c.l.b16 %v805
        %v992 = vunpack.c.h.b16 %v805
        %v993 = vunpack.c.l.b16 %v806
        %v994 = vunpack.c.h.b16 %v806
        %v995 = vunpack.c.l.b16 %v807
        %v996 = vunpack.c.h.b16 %v807
        %v997 = vunpack.c.l.b16 %v808
        %v998 = vunpack.c.h.b16 %v808
        %v999 = vunpack.c.l.b16 %v809
        %v1000 = vunpack.c.h.b16 %v809
        %v1001 = vunpack.c.l.b16 %v810
        %v1002 = vunpack.c.h.b16 %v810
        %v1003 = vunpack.c.l.b16 %v811
        %v1004 = vunpack.c.h.b16 %v811
        %v1005 = vunpack.c.l.b16 %v812
        %v1006 = vunpack.c.h.b16 %v812
        %v1007 = vunpack.c.l.b16 %v813
        %v1008 = vunpack.c.h.b16 %v813
        %v1009 = vunpack.c.l.b16 %v814
        %v1010 = vunpack.c.h.b16 %v814
        %v1011 = vunpack.c.l.b16 %v815
        %v1012 = vunpack.c.h.b16 %v815
        %v1013 = vunpack.c.l.b16 %v816
        %v1014 = vunpack.c.h.b16 %v816
        %v1015 = vunpack.c.l.b16 %v817
        %v1016 = vunpack.c.h.b16 %v817
        %v1017 = vunpack.c.l.b16 %v818
        %v1018 = vunpack.c.h.b16 %v818
        %v1019 = vlaneseq
        %v1020 = vand.u32 %v1019, 127
        %v1021 = vperm.slane %v891, %v1020
        %v1022 = vadd.s32 %v1020, 4294967288
        %v1023 = vperm.slane %v892, %v1022
        %vm1024 = vcmask 130112
        %v1025 = vsel %vm1024, %v1023, %v1021
        %v1026 = vadd.s32 %v1020, 4294967280
        %v1027 = vperm.slane %v893, %v1026
        %vm1028 = vcmask 195712
        %v1029 = vsel %vm1028, %v1027, %v1025
        %v1030 = vadd.s32 %v1020, 4294967272
        %v1031 = vperm.slane %v894, %v1030
        %vm1032 = vcmask 261312
        %v1033 = vsel %vm1032, %v1031, %v1029
        %v1034 = vadd.s32 %v1020, 4294967264
        %v1035 = vperm.slane %v895, %v1034
        %vm1036 = vcmask 326912
        %v1037 = vsel %vm1036, %v1035, %v1033
        %v1038 = vadd.s32 %v1020, 4294967256
        %v1039 = vperm.slane %v896, %v1038
        %vm1040 = vcmask 392512
        %v1041 = vsel %vm1040, %v1039, %v1037
        %v1042 = vadd.s32 %v1020, 4294967248
        %v1043 = vperm.slane %v897, %v1042
        %vm1044 = vcmask 458112
        %v1045 = vsel %vm1044, %v1043, %v1041
        %v1046 = vadd.s32 %v1020, 4294967240
        %v1047 = vperm.slane %v898, %v1046
        %vm1048 = vcmask 523712
        %v1049 = vsel %vm1048, %v1047, %v1045
        %v1050 = vperm.slane %v899, %v1020
        %v1051 = vperm.slane %v900, %v1022
        %v1052 = vsel %vm1024, %v1051, %v1050
        %v1053 = vperm.slane %v901, %v1026
        %v1054 = vsel %vm1028, %v1053, %v1052
        %v1055 = vperm.slane %v902, %v1030
        %v1056 = vsel %vm1032, %v1055, %v1054
        %v1057 = vperm.slane %v903, %v1034
        %v1058 = vsel %vm1036, %v1057, %v1056
        %v1059 = vperm.slane %v904, %v1038
        %v1060 = vsel %vm1040, %v1059, %v1058
        %v1061 = vperm.slane %v905, %v1042
        %v1062 = vsel %vm1044, %v1061, %v1060
        %v1063 = vperm.slane %v906, %v1046
        %v1064 = vsel %vm1048, %v1063, %v1062
        %v1065 = vperm.slane %v907, %v1020
        %v1066 = vperm.slane %v908, %v1022
        %v1067 = vsel %vm1024, %v1066, %v1065
        %v1068 = vperm.slane %v909, %v1026
        %v1069 = vsel %vm1028, %v1068, %v1067
        %v1070 = vperm.slane %v910, %v1030
        %v1071 = vsel %vm1032, %v1070, %v1069
        %v1072 = vperm.slane %v911, %v1034
        %v1073 = vsel %vm1036, %v1072, %v1071
        %v1074 = vperm.slane %v912, %v1038
        %v1075 = vsel %vm1040, %v1074, %v1073
        %v1076 = vperm.slane %v913, %v1042
        %v1077 = vsel %vm1044, %v1076, %v1075
        %v1078 = vperm.slane %v914, %v1046
        %v1079 = vsel %vm1048, %v1078, %v1077
        %v1080 = vperm.slane %v915, %v1020
        %v1081 = vperm.slane %v916, %v1022
        %v1082 = vsel %vm1024, %v1081, %v1080
        %v1083 = vperm.slane %v917, %v1026
        %v1084 = vsel %vm1028, %v1083, %v1082
        %v1085 = vperm.slane %v918, %v1030
        %v1086 = vsel %vm1032, %v1085, %v1084
        %v1087 = vperm.slane %v919, %v1034
        %v1088 = vsel %vm1036, %v1087, %v1086
        %v1089 = vperm.slane %v920, %v1038
        %v1090 = vsel %vm1040, %v1089, %v1088
        %v1091 = vperm.slane %v921, %v1042
        %v1092 = vsel %vm1044, %v1091, %v1090
        %v1093 = vperm.slane %v922, %v1046
        %v1094 = vsel %vm1048, %v1093, %v1092
        %v1095 = vperm.slane %v923, %v1020
        %v1096 = vperm.slane %v924, %v1022
        %v1097 = vsel %vm1024, %v1096, %v1095
        %v1098 = vperm.slane %v925, %v1026
        %v1099 = vsel %vm1028, %v1098, %v1097
        %v1100 = vperm.slane %v926, %v1030
        %v1101 = vsel %vm1032, %v1100, %v1099
        %v1102 = vperm.slane %v927, %v1034
        %v1103 = vsel %vm1036, %v1102, %v1101
        %v1104 = vperm.slane %v928, %v1038
        %v1105 = vsel %vm1040, %v1104, %v1103
        %v1106 = vperm.slane %v929, %v1042
        %v1107 = vsel %vm1044, %v1106, %v1105
        %v1108 = vperm.slane %v930, %v1046
        %v1109 = vsel %vm1048, %v1108, %v1107
        %v1110 = vperm.slane %v931, %v1020
        %v1111 = vperm.slane %v932, %v1022
        %v1112 = vsel %vm1024, %v1111, %v1110
        %v1113 = vperm.slane %v933, %v1026
        %v1114 = vsel %vm1028, %v1113, %v1112
        %v1115 = vperm.slane %v934, %v1030
        %v1116 = vsel %vm1032, %v1115, %v1114
        %v1117 = vperm.slane %v935, %v1034
        %v1118 = vsel %vm1036, %v1117, %v1116
        %v1119 = vperm.slane %v936, %v1038
        %v1120 = vsel %vm1040, %v1119, %v1118
        %v1121 = vperm.slane %v937, %v1042
        %v1122 = vsel %vm1044, %v1121, %v1120
        %v1123 = vperm.slane %v938, %v1046
        %v1124 = vsel %vm1048, %v1123, %v1122
        %v1125 = vperm.slane %v939, %v1020
        %v1126 = vperm.slane %v940, %v1022
        %v1127 = vsel %vm1024, %v1126, %v1125
        %v1128 = vperm.slane %v941, %v1026
        %v1129 = vsel %vm1028, %v1128, %v1127
        %v1130 = vperm.slane %v942, %v1030
        %v1131 = vsel %vm1032, %v1130, %v1129
        %v1132 = vperm.slane %v943, %v1034
        %v1133 = vsel %vm1036, %v1132, %v1131
        %v1134 = vperm.slane %v944, %v1038
        %v1135 = vsel %vm1040, %v1134, %v1133
        %v1136 = vperm.slane %v945, %v1042
        %v1137 = vsel %vm1044, %v1136, %v1135
        %v1138 = vperm.slane %v946, %v1046
        %v1139 = vsel %vm1048, %v1138, %v1137
        %v1140 = vperm.slane %v947, %v1020
        %v1141 = vperm.slane %v948, %v1022
        %v1142 = vsel %vm1024, %v1141, %v1140
        %v1143 = vperm.slane %v949, %v1026
        %v1144 = vsel %vm1028, %v1143, %v1142
        %v1145 = vperm.slane %v950, %v1030
        %v1146 = vsel %vm1032, %v1145, %v1144
        %v1147 = vperm.slane %v951, %v1034
        %v1148 = vsel %vm1036, %v1147, %v1146
        %v1149 = vperm.slane %v952, %v1038
        %v1150 = vsel %vm1040, %v1149, %v1148
        %v1151 = vperm.slane %v953, %v1042
        %v1152 = vsel %vm1044, %v1151, %v1150
        %v1153 = vperm.slane %v954, %v1046
        %v1154 = vsel %vm1048, %v1153, %v1152
        %v1155 = vperm.slane %v955, %v1020
        %v1156 = vperm.slane %v956, %v1022
        %v1157 = vsel %vm1024, %v1156, %v1155
        %v1158 = vperm.slane %v957, %v1026
        %v1159 = vsel %vm1028, %v1158, %v1157
        %v1160 = vperm.slane %v958, %v1030
        %v1161 = vsel %vm1032, %v1160, %v1159
        %v1162 = vperm.slane %v959, %v1034
        %v1163 = vsel %vm1036, %v1162, %v1161
        %v1164 = vperm.slane %v960, %v1038
        %v1165 = vsel %vm1040, %v1164, %v1163
        %v1166 = vperm.slane %v961, %v1042
        %v1167 = vsel %vm1044, %v1166, %v1165
        %v1168 = vperm.slane %v962, %v1046
        %v1169 = vsel %vm1048, %v1168, %v1167
        %v1170 = vperm.slane %v963, %v1020
        %v1171 = vperm.slane %v964, %v1022
        %v1172 = vsel %vm1024, %v1171, %v1170
        %v1173 = vperm.slane %v965, %v1026
        %v1174 = vsel %vm1028, %v1173, %v1172
        %v1175 = vperm.slane %v966, %v1030
        %v1176 = vsel %vm1032, %v1175, %v1174
        %v1177 = vperm.slane %v967, %v1034
        %v1178 = vsel %vm1036, %v1177, %v1176
        %v1179 = vperm.slane %v968, %v1038
        %v1180 = vsel %vm1040, %v1179, %v1178
        %v1181 = vperm.slane %v969, %v1042
        %v1182 = vsel %vm1044, %v1181, %v1180
        %v1183 = vperm.slane %v970, %v1046
        %v1184 = vsel %vm1048, %v1183, %v1182
        %v1185 = vperm.slane %v971, %v1020
        %v1186 = vperm.slane %v972, %v1022
        %v1187 = vsel %vm1024, %v1186, %v1185
        %v1188 = vperm.slane %v973, %v1026
        %v1189 = vsel %vm1028, %v1188, %v1187
        %v1190 = vperm.slane %v974, %v1030
        %v1191 = vsel %vm1032, %v1190, %v1189
        %v1192 = vperm.slane %v975, %v1034
        %v1193 = vsel %vm1036, %v1192, %v1191
        %v1194 = vperm.slane %v976, %v1038
        %v1195 = vsel %vm1040, %v1194, %v1193
        %v1196 = vperm.slane %v977, %v1042
        %v1197 = vsel %vm1044, %v1196, %v1195
        %v1198 = vperm.slane %v978, %v1046
        %v1199 = vsel %vm1048, %v1198, %v1197
        %v1200 = vperm.slane %v979, %v1020
        %v1201 = vperm.slane %v980, %v1022
        %v1202 = vsel %vm1024, %v1201, %v1200
        %v1203 = vperm.slane %v981, %v1026
        %v1204 = vsel %vm1028, %v1203, %v1202
        %v1205 = vperm.slane %v982, %v1030
        %v1206 = vsel %vm1032, %v1205, %v1204
        %v1207 = vperm.slane %v983, %v1034
        %v1208 = vsel %vm1036, %v1207, %v1206
        %v1209 = vperm.slane %v984, %v1038
        %v1210 = vsel %vm1040, %v1209, %v1208
        %v1211 = vperm.slane %v985, %v1042
        %v1212 = vsel %vm1044, %v1211, %v1210
        %v1213 = vperm.slane %v986, %v1046
        %v1214 = vsel %vm1048, %v1213, %v1212
        %v1215 = vperm.slane %v987, %v1020
        %v1216 = vperm.slane %v988, %v1022
        %v1217 = vsel %vm1024, %v1216, %v1215
        %v1218 = vperm.slane %v989, %v1026
        %v1219 = vsel %vm1028, %v1218, %v1217
        %v1220 = vperm.slane %v990, %v1030
        %v1221 = vsel %vm1032, %v1220, %v1219
        %v1222 = vperm.slane %v991, %v1034
        %v1223 = vsel %vm1036, %v1222, %v1221
        %v1224 = vperm.slane %v992, %v1038
        %v1225 = vsel %vm1040, %v1224, %v1223
        %v1226 = vperm.slane %v993, %v1042
        %v1227 = vsel %vm1044, %v1226, %v1225
        %v1228 = vperm.slane %v994, %v1046
        %v1229 = vsel %vm1048, %v1228, %v1227
        %v1230 = vperm.slane %v995, %v1020
        %v1231 = vperm.slane %v996, %v1022
        %v1232 = vsel %vm1024, %v1231, %v1230
        %v1233 = vperm.slane %v997, %v1026
        %v1234 = vsel %vm1028, %v1233, %v1232
        %v1235 = vperm.slane %v998, %v1030
        %v1236 = vsel %vm1032, %v1235, %v1234
        %v1237 = vperm.slane %v999, %v1034
        %v1238 = vsel %vm1036, %v1237, %v1236
        %v1239 = vperm.slane %v1000, %v1038
        %v1240 = vsel %vm1040, %v1239, %v1238
        %v1241 = vperm.slane %v1001, %v1042
        %v1242 = vsel %vm1044, %v1241, %v1240
        %v1243 = vperm.slane %v1002, %v1046
        %v1244 = vsel %vm1048, %v1243, %v1242
        %v1245 = vperm.slane %v1003, %v1020
        %v1246 = vperm.slane %v1004, %v1022
        %v1247 = vsel %vm1024, %v1246, %v1245
        %v1248 = vperm.slane %v1005, %v1026
        %v1249 = vsel %vm1028, %v1248, %v1247
        %v1250 = vperm.slane %v1006, %v1030
        %v1251 = vsel %vm1032, %v1250, %v1249
        %v1252 = vperm.slane %v1007, %v1034
        %v1253 = vsel %vm1036, %v1252, %v1251
        %v1254 = vperm.slane %v1008, %v1038
        %v1255 = vsel %vm1040, %v1254, %v1253
        %v1256 = vperm.slane %v1009, %v1042
        %v1257 = vsel %vm1044, %v1256, %v1255
        %v1258 = vperm.slane %v1010, %v1046
        %v1259 = vsel %vm1048, %v1258, %v1257
        %v1260 = vperm.slane %v1011, %v1020
        %v1261 = vperm.slane %v1012, %v1022
        %v1262 = vsel %vm1024, %v1261, %v1260
        %v1263 = vperm.slane %v1013, %v1026
        %v1264 = vsel %vm1028, %v1263, %v1262
        %v1265 = vperm.slane %v1014, %v1030
        %v1266 = vsel %vm1032, %v1265, %v1264
        %v1267 = vperm.slane %v1015, %v1034
        %v1268 = vsel %vm1036, %v1267, %v1266
        %v1269 = vperm.slane %v1016, %v1038
        %v1270 = vsel %vm1040, %v1269, %v1268
        %v1271 = vperm.slane %v1017, %v1042
        %v1272 = vsel %vm1044, %v1271, %v1270
        %v1273 = vperm.slane %v1018, %v1046
        %v1274 = vsel %vm1048, %v1273, %v1272
        %vm1275 = vcmask 1041409
        %v1276 = vsel %vm1275, %v1064, %v1049
        %vm1277 = vcmask 1042434
        %v1278 = vsel %vm1277, %v1079, %v1276
        %vm1279 = vcmask 1043459
        %v1280 = vsel %vm1279, %v1094, %v1278
        %vm1281 = vcmask 1044484
        %v1282 = vsel %vm1281, %v1109, %v1280
        %vm1283 = vcmask 1045509
        %v1284 = vsel %vm1283, %v1124, %v1282
        %vm1285 = vcmask 1046534
        %v1286 = vsel %vm1285, %v1139, %v1284
        %vm1287 = vcmask 1047559
        %v1288 = vsel %vm1287, %v1154, %v1286
        %v1289 = vsel %vm1275, %v1184, %v1169
        %v1290 = vsel %vm1277, %v1199, %v1289
        %v1291 = vsel %vm1279, %v1214, %v1290
        %v1292 = vsel %vm1281, %v1229, %v1291
        %v1293 = vsel %vm1283, %v1244, %v1292
        %v1294 = vsel %vm1285, %v1259, %v1293
        %v1295 = vsel %vm1287, %v1274, %v1294
        %v1296 = vpack.c.b16 %v1295, %v1288
        %v1305 = vunpack.c.l.b16 %v819
        %v1306 = vunpack.c.l.b16 %v820
        %v1307 = vunpack.c.l.b16 %v821
        %v1308 = vunpack.c.l.b16 %v822
        %v1309 = vunpack.c.l.b16 %v823
        %v1310 = vunpack.c.l.b16 %v824
        %v1311 = vunpack.c.l.b16 %v825
        %v1312 = vunpack.c.l.b16 %v826
        %v1313 = vpack.c.b16 %v1306, %v1305
        %v1314 = vpack.c.b16 %v1308, %v1307
        %v1315 = vpack.c.b16 %v1310, %v1309
        %v1316 = vpack.c.b16 %v1312, %v1311
        %v1322 = vsel %vm370, %v1296, 0
        %1324 = vmatpush.bf16.msra.mxu0 0
        %1325 = vmatpush.bf16.msra.mxu0 0
        %1326 = vmatpush.bf16.msra.mxu0 0
        %1327 = vmatpush.bf16.msra.mxu0 0
        %1328 = vmatpush.bf16.msra.mxu0 %v1316
        %1329 = vmatpush.bf16.msra.mxu0 %v1315
        %1330 = vmatpush.bf16.msra.mxu0 %v1314
        %1331 = vmatpush.bf16.msra.mxu0 %v1313
        %1332 = vmatmul.bf16.gmra.mxu0 %v1322
        %v1333 = vpop.f32.mrf.mxu0
        %v1334 = vadd.f32 0.0, %v1333
        %v1335 = vpop.f32.mrf.mxu0
        %v1336 = vadd.f32 0.0, %v1335
        %1337 = vdwg.mxu0
        %v1338 = vpack.c.bf16 %v1334, %v1334
        %v1339 = vpack.c.bf16 %v1336, %v1336
        %1340 = vst [vmem:[%s229] sm:$0xf] %v1338
        %1341 = vst [vmem:[%s229 + $0x4] sm:$0xf] %v1339
        %p1342 = scmp.eq.s32.totalorder %s30, 0
        // Predicated region
        $region37: #{tpu_custom_call.1} parent=27 // pred_check
          %p1343 = pneg %p1342
        $region38: #{tpu_custom_call.1} parent=27 // pred_check_branch
          %1345 = sbr.rel (%p1343) target = $region40
        $region39: #{tpu_custom_call.1} parent=27 // pred_region
          %1346 = vst [vmem:[%s236] sm:$0x3] 0.0
        $region40: #{tpu_custom_call.1} parent=27 // pred_fallthru
          _
        %v1347 = vld [vmem:[%s236] sm:$0x3]
        %v1348 = vadd.f32 %v1334, %v1336
        %v1349 = vrot.slane %v1348, 4
        %v1350 = vadd.f32 %v1348, %v1349
        %v1351 = vrot.slane %v1350, 2
        %v1352 = vadd.f32 %v1350, %v1351
        %v1353 = vrot.slane %v1352, 1
        %v1354 = vadd.f32 %v1352, %v1353
        %v1355 = vmul.f32 %v1334, %v1334
        %v1356 = vmul.f32 %v1336, %v1336
        %v1357 = vadd.f32 %v1355, %v1356
        %v1358 = vrot.slane %v1357, 4
        %v1359 = vadd.f32 %v1357, %v1358
        %v1360 = vrot.slane %v1359, 2
        %v1361 = vadd.f32 %v1359, %v1360
        %v1362 = vrot.slane %v1361, 1
        %v1363 = vadd.f32 %v1361, %v1362
        %vm1364 = vcmask 1040384
        %v1365 = vsel %vm1364, %v1354, %v1363
        %v1366 = vadd.f32 %v1347, %v1365
        %1367 = vst [vmem:[%s236] sm:$0x3] %v1366
        %s1368 = sand.u32 %s96, 1
        %s1369 = scalar_lea.sflag [#allocation4], %s1368
        %s1370 = sand.u32 %s96, 1
        %s1371 = smul.addr %s1370, 8
        %s1372 = scalar_lea.vmem [#allocation7], %s1371
        %s1373 = sand.u32 %s122, 1
        %s1374 = scalar_lea.sflag [#allocation9], %s1373
        %s1375 = sand.u32 %s122, 1
        %s1376 = smul.addr %s1375, 2
        %s1377 = scalar_lea.vmem [#allocation8], %s1376
        // Predicated region
        $region41: #{tpu_custom_call.1} parent=27 // pred_check
          %p1378 = pneg %p106
        $region42: #{tpu_custom_call.1} parent=27 // pred_check_branch
          %1380 = sbr.rel (%p1378) target = $region44
        $region43: #{tpu_custom_call.1} parent=27 // pred_region
          %s1381 = sadd.s32 %s29, %s30
          %s1382 = smul.u32 2, %s1381
          %1384 = vsyncadd %s1369, 0
          %s1385 = smul.addr %s1382, 4
          %s1386 = scalar_lea.hbm %s2, %s1385
          %s1387 = sshll.u32 %s1372, 4
          %s1388 = int_to_ptr.vmem [resolvable:$true] %s1387
          %s1389 = sshll.u32 %s1386, 4
          %s1390 = int_to_ptr.hbm [resolvable:$true] %s1389
          %1395 = dma.vmem_to_hbm [thread:$0]  %s1388, 128, %s1390, %s1369, 64, 64, 4
        $region44: #{tpu_custom_call.1} parent=27 // pred_fallthru
          _
        // Predicated region
        $region45: #{tpu_custom_call.1} parent=27 // pred_check
          %p1396 = pneg %p132
        $region46: #{tpu_custom_call.1} parent=27 // pred_check_branch
          %1398 = sbr.rel (%p1396) target = $region48
        $region47: #{tpu_custom_call.1} parent=27 // pred_region
          %1400 = vsyncadd %s1374, 0
          %s1401 = smul.addr %s29, 2
          %s1402 = scalar_lea.hbm %s3, %s1401
          %s1404 = sshll.u32 %s1377, 4
          %s1405 = int_to_ptr.vmem [resolvable:$true] %s1404
          %s1406 = sshll.u32 %s1402, 4
          %s1407 = int_to_ptr.hbm [resolvable:$true] %s1406
          %1409 = dma.vmem_to_hbm [thread:$0]  %s1405, 32, %s1407, %s1374
        $region48: #{tpu_custom_call.1} parent=27 // pred_fallthru
          _
      $region28: #{tpu_custom_call.1} parent=5 // pred_fallthru
        _
      %p1410 = scmp.le.s32.totalorder 2, %s20
      // Predicated region
      $region49: #{tpu_custom_call.1} parent=5 // pred_check
        %p1411 = pneg %p1410
      $region50: #{tpu_custom_call.1} parent=5 // pred_check_branch
        %1413 = sbr.rel (%p1411) target = $region52
      $region51: #{tpu_custom_call.1} parent=5 // pred_region
        %s1414 = ssub.s32 %s20, 2
        // Predicated region
        $region53: #{tpu_custom_call.1} parent=51 // pred_check
          %p1415 = pneg %p112
        $region54: #{tpu_custom_call.1} parent=51 // pred_check_branch
          %1417 = sbr.rel (%p1415) target = $region56
        $region55: #{tpu_custom_call.1} parent=51 // pred_region
          %s1418 = sand.u32 %s97, 1
          %s1419 = scalar_lea.sflag [#allocation4], %s1418
          %s1420 = sand.u32 %s97, 1
          %s1421 = smul.addr %s1420, 8
          %s1422 = scalar_lea.vmem [#allocation7], %s1421
          %1424 = dma.done %s1419, 128
        $region56: #{tpu_custom_call.1} parent=51 // pred_fallthru
          _
        // Predicated region
        $region57: #{tpu_custom_call.1} parent=51 // pred_check
          %p1425 = pneg %p138
        $region58: #{tpu_custom_call.1} parent=51 // pred_check_branch
          %1427 = sbr.rel (%p1425) target = $region60
        $region59: #{tpu_custom_call.1} parent=51 // pred_region
          %s1428 = sand.u32 %s123, 1
          %s1429 = scalar_lea.sflag [#allocation9], %s1428
          %s1430 = sand.u32 %s123, 1
          %s1431 = smul.addr %s1430, 2
          %s1432 = scalar_lea.vmem [#allocation8], %s1431
          %1434 = dma.done %s1429, 32
        $region60: #{tpu_custom_call.1} parent=51 // pred_fallthru
          _
      $region52: #{tpu_custom_call.1} parent=5 // pred_fallthru
        _
    $region6: #{tpu_custom_call.1} parent=1 // loop_footer
      %s24 = sadd.s32 1, %s20
    $region7: #{tpu_custom_call.1} parent=1 // loop_footer_branch
      %19 = sbr.rel target = $region3
    $region8: #{tpu_custom_call.1} parent=1 // loop_exit
      _
    %1435 = vsyncpa [#allocation3], 1
    %s1436 = scalar_lea.sflag [#allocation3], 1
    %1437 = vsyncpa %s1436, 1
    %1438 = vsyncpa [#allocation6], 1
    %1439 = vsyncpa [#allocation4], 1
    %s1440 = scalar_lea.sflag [#allocation4], 1
    %1441 = vsyncpa %s1440, 1
    %1442 = vsyncpa [#allocation9], 1
    %s1443 = scalar_lea.sflag [#allocation9], 1
    %1444 = vsyncpa %s1443, 1

</llo_original>
